<compile_context>
chip_gen: v6e
topology: v6e:2x2x1
jax: 0.10.0
libtpu: 0.0.40
codegen_flags: <defaults>
</compile_context>

<pallas_src>
import functools

import jax
import jax.numpy as jnp
from jax.experimental import pallas as pl
from jax.experimental.pallas import tpu as pltpu


def _excitation_dropout_kernel(x_ref, u_ref, o_ref, *, base_p):
    x = x_ref[...].astype(jnp.float32)
    u = u_ref[...]

    # p_keep = 1 - base_p * sigmoid(x); sigmoid written via exp (EUP op).
    sig = 1.0 / (1.0 + jnp.exp(-x))
    p_keep = 1.0 - jnp.float32(base_p) * sig

    # keep -> x / p_keep, drop -> 0  (compare + select on the VPU).
    out = jnp.where(u < p_keep, x / p_keep, jnp.float32(0.0))
    o_ref[...] = out.astype(o_ref.dtype)


def excitation_dropout(x, key, *, base_p=0.5, training=True, block_rows=1024):
    """Pallas TPU implementation of ExcitationDropout.forward."""
    if (not training) or base_p == 0.0:
        return x

    orig_shape = x.shape
    total = x.size
    cols = 128

    # Flatten to a lane-dense 2D slab; pad so rows divide evenly into tiles.
    rows = -(-total // cols)                      # ceil(total / 128)
    br = min(int(block_rows), rows)
    br = ((max(br, 8) + 7) // 8) * 8              # sublane-aligned tile rows
    rows_padded = ((rows + br - 1) // br) * br
    padded_total = rows_padded * cols

    xf = x.reshape(-1)
    pad = padded_total - total
    if pad:
        xf = jnp.pad(xf, (0, pad))
    x2 = xf.reshape(rows_padded, cols)

    # Uniform [0,1) randoms, same tiling as x -> independent mask per tile.
    u2 = jax.random.uniform(key, (rows_padded, cols), dtype=jnp.float32)

    grid = (rows_padded // br,)
    itemsize = jnp.dtype(x.dtype).itemsize
    cost = pl.CostEstimate(
        flops=6 * padded_total,                    # sigmoid combine, cmp, div, sel
        transcendentals=padded_total,              # exp
        bytes_accessed=padded_total * (2 * itemsize + 4),  # x in, u in, out
    )

    out = pl.pallas_call(
        functools.partial(_excitation_dropout_kernel, base_p=float(base_p)),
        out_shape=jax.ShapeDtypeStruct((rows_padded, cols), x.dtype),
        grid=grid,
        in_specs=[
            pl.BlockSpec((br, cols), lambda i: (i, 0)),   # activations tile
            pl.BlockSpec((br, cols), lambda i: (i, 0)),   # uniform randoms tile
        ],
        out_specs=pl.BlockSpec((br, cols), lambda i: (i, 0)),
        compiler_params=pltpu.CompilerParams(
            dimension_semantics=("parallel",)),
        cost_estimate=cost,
    )(x2, u2)

    return out.reshape(-1)[:total].reshape(orig_shape)


if __name__ == "__main__":
    root = jax.random.PRNGKey(0)
    kx, kdrop = jax.random.split(root)

    # NCHW, matching the PyTorch conv-activation convention.
    x = jax.random.normal(kx, (2, 4, 16, 16), dtype=jnp.float32)

    base_p = 0.5
    y = excitation_dropout(x, kdrop, base_p=base_p, training=True)
    y = jax.block_until_ready(y)

    # Sanity checks on the dropout semantics:
    #  - every output element is either 0 (dropped) or x / p_keep (kept).
    p_keep = 1.0 - base_p * jax.nn.sigmoid(x)
    kept_val = x / p_keep
    is_zero = jnp.isclose(y, 0.0, atol=1e-6)
    is_kept = jnp.isclose(y, kept_val, rtol=1e-5, atol=1e-6)
    assert bool(jnp.all(is_zero | is_kept)), "output not consistent with mask semantics"
    # Some elements kept, some dropped (statistically certain at these sizes).
    assert bool(jnp.any(is_zero)) and bool(jnp.any(~is_zero))
    # Eval mode is identity.
    y_eval = excitation_dropout(x, kdrop, base_p=base_p, training=False)
    assert bool(jnp.all(y_eval == x))

    print("KERNEL_OK")
</pallas_src>

<mosaic_0001>
module attributes {stable_mosaic.version = 11 : i64} {
  func.func @_excitation_dropout_kernel(%arg0: i32, %arg1: memref<16x128xf32, #tpu.memory_space<vmem>>, %arg2: memref<16x128xf32, #tpu.memory_space<vmem>>, %arg3: memref<16x128xf32, #tpu.memory_space<vmem>>) attributes {dimension_semantics = [#tpu.dimension_semantics<parallel>], iteration_bounds = array<i64: 1>, scalar_prefetch = 0 : i64, scratch_operands = 0 : i64, tpu.core_type = #tpu.core_type<tc>, window_params = [{transform_indices = @transform_0, window_bounds = array<i64: 16, 128>}, {transform_indices = @transform_1, window_bounds = array<i64: 16, 128>}, {transform_indices = @transform_2, window_bounds = array<i64: 16, 128>}]} {
    %c0 = arith.constant 0 : index
    %c0_0 = arith.constant 0 : index
    %0 = vector.load %arg1[%c0, %c0_0] : memref<16x128xf32, #tpu.memory_space<vmem>>, vector<16x128xf32>
    %c0_1 = arith.constant 0 : index
    %c0_2 = arith.constant 0 : index
    %1 = vector.load %arg2[%c0_1, %c0_2] : memref<16x128xf32, #tpu.memory_space<vmem>>, vector<16x128xf32>
    %cst = arith.constant 0.000000e+00 : f32
    %2 = vector.broadcast %cst : f32 to vector<16x128xf32>
    %3 = arith.subf %2, %0 : vector<16x128xf32>
    %4 = math.exp %3 : vector<16x128xf32>
    %cst_3 = arith.constant 1.000000e+00 : f32
    %5 = vector.broadcast %cst_3 : f32 to vector<16x128xf32>
    %6 = arith.addf %5, %4 : vector<16x128xf32>
    %cst_4 = arith.constant 1.000000e+00 : f32
    %7 = vector.broadcast %cst_4 : f32 to vector<16x128xf32>
    %8 = arith.divf %7, %6 : vector<16x128xf32>
    %cst_5 = arith.constant 5.000000e-01 : f32
    %9 = vector.broadcast %cst_5 : f32 to vector<16x128xf32>
    %10 = arith.mulf %9, %8 : vector<16x128xf32>
    %cst_6 = arith.constant 1.000000e+00 : f32
    %11 = vector.broadcast %cst_6 : f32 to vector<16x128xf32>
    %12 = arith.subf %11, %10 : vector<16x128xf32>
    %13 = arith.cmpf olt, %1, %12 : vector<16x128xf32>
    %14 = arith.divf %0, %12 : vector<16x128xf32>
    %cst_7 = arith.constant 0.000000e+00 : f32
    %15 = vector.broadcast %cst_7 : f32 to vector<16x128xf32>
    %16 = arith.select %13, %14, %15 : vector<16x128xi1>, vector<16x128xf32>
    %c0_8 = arith.constant 0 : index
    %c0_9 = arith.constant 0 : index
    %17 = vector.load %arg3[%c0_8, %c0_9] : memref<16x128xf32, #tpu.memory_space<vmem>>, vector<16x128xf32>
    tpu.vector_store %arg3[%c0_8, %c0_9], %16 {strides = array<i32>} : memref<16x128xf32, #tpu.memory_space<vmem>>, vector<16x128xf32>,
    return
  }
  func.func @transform_0(%arg0: i32) -> (i32, i32) {
    %c0_i32 = arith.constant 0 : i32
    %c0_i32_0 = arith.constant 0 : i32
    return %arg0, %c0_i32 : i32, i32
  }
  func.func @transform_1(%arg0: i32) -> (i32, i32) {
    %c0_i32 = arith.constant 0 : i32
    %c0_i32_0 = arith.constant 0 : i32
    return %arg0, %c0_i32 : i32, i32
  }
  func.func @transform_2(%arg0: i32) -> (i32, i32) {
    %c0_i32 = arith.constant 0 : i32
    %c0_i32_0 = arith.constant 0 : i32
    return %arg0, %c0_i32 : i32, i32
  }
}

</mosaic_0001>

<llo_original>
// kernel: tpu_custom_call.1
$region0: #{tpu_custom_call.1}
  #allocation0 [shape = 'u32[]', space=smem, size = 0x4, offset = 0x4, fixed_abs, tag = 'smem constant byte address 0x4 - core index']
  #allocation1 [shape = 'u32[144,128]{1,0:T(1,128)}', space=vmem, size = 0x12000, scoped, tag = 'internal scratch']
  %s0 = inlined_call_operand.hbm [shape: f32[16,128], index: 0, kind: input, shape index: {}]
  %s1 = inlined_call_operand.hbm [shape: f32[16,128], index: 1, kind: input, shape index: {}]
  %s2 = inlined_call_operand.hbm [shape: f32[16,128], index: 2, kind: output, shape index: {}]
  %s3 = sld [smem:[#allocation0]]
  $region26: #{tpu_custom_call.1} parent=0
    _
  %s5 = ssub.s32 1, %s3
  %s6 = scalar_select 0, %s5, %s3
  $region1: #{tpu_custom_call.1} parent=0
    #allocation2 [shape = 'u8[8192]{0}', space=vmem, size = 0x2000, scoped, tag = 'input window, operand 0, single buffered']
    #allocation3 [shape = 's32[1]{0}', space=sflag, size = 0x4, scoped, tag = 'scoped memory for tpu_custom_call.1']
    #allocation4 [shape = 's32[1]{0}', space=sflag, size = 0x4, scoped, tag = 'scoped memory for tpu_custom_call.1']
    #allocation5 [shape = 'u8[8192]{0}', space=vmem, size = 0x2000, scoped, tag = 'input window, operand 1, single buffered']
    #allocation6 [shape = 's32[1]{0}', space=sflag, size = 0x4, scoped, tag = 'scoped memory for tpu_custom_call.1']
    #allocation7 [shape = 'u8[8192]{0}', space=vmem, size = 0x2000, scoped, tag = 'output window, operand 0, single buffered']
    %7 = vsyncpa [#allocation3], 0
    %8 = vsyncpa [#allocation6], 0
    %9 = vsyncpa [#allocation4], 0
    // Predicated region
    $region2: #{tpu_custom_call.1} parent=1 // pred_check
      _
    $region3: #{tpu_custom_call.1} parent=1 // pred_check_branch
      %11 = sbr.rel (0) target = $region5
    $region4: #{tpu_custom_call.1} parent=1 // pred_region
      %s13 = ssub.s32 256, 256
      %14 = vsyncadd [#allocation3], %s13
      %s15 = sshll.u32 [#allocation2], 4
      %s16 = int_to_ptr.vmem [resolvable:$true] %s15
      %21 = dma.hbm_to_vmem [thread:$0]  %s0, 256, %s16, [#allocation3], 128, 128, 8
    $region5: #{tpu_custom_call.1} parent=1 // pred_fallthru
      _
    // Predicated region
    $region6: #{tpu_custom_call.1} parent=1 // pred_check
      _
    $region7: #{tpu_custom_call.1} parent=1 // pred_check_branch
      %23 = sbr.rel (0) target = $region9
    $region8: #{tpu_custom_call.1} parent=1 // pred_region
      %s25 = ssub.s32 256, 256
      %26 = vsyncadd [#allocation6], %s25
      %s27 = sshll.u32 [#allocation5], 4
      %s28 = int_to_ptr.vmem [resolvable:$true] %s27
      %33 = dma.hbm_to_vmem [thread:$0]  %s1, 256, %s28, [#allocation6], 128, 128, 8
    $region9: #{tpu_custom_call.1} parent=1 // pred_fallthru
      _
    // Predicated region
    $region10: #{tpu_custom_call.1} parent=1 // pred_check
      _
    $region11: #{tpu_custom_call.1} parent=1 // pred_check_branch
      %35 = sbr.rel (0) target = $region13
    $region12: #{tpu_custom_call.1} parent=1 // pred_region
      %36 = dma.done [#allocation3], 256
    $region13: #{tpu_custom_call.1} parent=1 // pred_fallthru
      _
    // Predicated region
    $region14: #{tpu_custom_call.1} parent=1 // pred_check
      _
    $region15: #{tpu_custom_call.1} parent=1 // pred_check_branch
      %38 = sbr.rel (0) target = $region17
    $region16: #{tpu_custom_call.1} parent=1 // pred_region
      %39 = dma.done [#allocation6], 256
    $region17: #{tpu_custom_call.1} parent=1 // pred_fallthru
      _
    %v40 = vld [vmem:[#allocation2] sm:$0xff]
    %v41 = vld [vmem:[#allocation2 + $0x8] sm:$0xff]
    %v42 = vld [vmem:[#allocation5] sm:$0xff]
    %v43 = vld [vmem:[#allocation5 + $0x8] sm:$0xff]
    %v44 = vsub.f32 0.0, %v40
    %v45 = vsub.f32 0.0, %v41
    %v46 = vmul.f32 %v44, 1.442695
    %v47 = vpow.pop %v46
    %v48 = vmul.f32 %v45, 1.442695
    %v49 = vpow.pop %v48
    %v50 = vadd.f32 %v47, 1.0
    %v51 = vadd.f32 %v49, 1.0
    %v52 = vrcp.pop %v50
    %v53 = vmul.f32 1.0, %v52
    %v54 = vrcp.pop %v51
    %v55 = vmul.f32 1.0, %v54
    %v56 = vmul.f32 %v53, 0.5
    %v57 = vmul.f32 %v55, 0.5
    %v58 = vsub.f32 1.0, %v56
    %v59 = vsub.f32 1.0, %v57
    %vm60 = vcmp.lt.f32.partialorder %v42, %v58
    %vm61 = vcmp.lt.f32.partialorder %v43, %v59
    %v62 = vrcp.pop %v58
    %v63 = vmul.f32 %v40, %v62
    %v64 = vrcp.pop %v59
    %v65 = vmul.f32 %v41, %v64
    %v66 = vsel %vm60, %v63, 0.0
    %v67 = vsel %vm61, %v65, 0.0
    %68 = vst [vmem:[#allocation7] sm:$0xff] %v66
    %69 = vst [vmem:[#allocation7 + $0x8] sm:$0xff] %v67
    // Predicated region
    $region18: #{tpu_custom_call.1} parent=1 // pred_check
      _
    $region19: #{tpu_custom_call.1} parent=1 // pred_check_branch
      %71 = sbr.rel (0) target = $region21
    $region20: #{tpu_custom_call.1} parent=1 // pred_region
      %s73 = ssub.s32 256, 256
      %74 = vsyncadd [#allocation4], %s73
      %s75 = sshll.u32 [#allocation7], 4
      %s76 = int_to_ptr.vmem [resolvable:$true] %s75
      %81 = dma.vmem_to_hbm [thread:$0]  %s76, 256, %s2, [#allocation4], 128, 128, 8
    $region21: #{tpu_custom_call.1} parent=1 // pred_fallthru
      _
    // Predicated region
    $region22: #{tpu_custom_call.1} parent=1 // pred_check
      _
    $region23: #{tpu_custom_call.1} parent=1 // pred_check_branch
      %83 = sbr.rel (0) target = $region25
    $region24: #{tpu_custom_call.1} parent=1 // pred_region
      %84 = dma.done [#allocation4], 256
    $region25: #{tpu_custom_call.1} parent=1 // pred_fallthru
      _
    %85 = vsyncpa [#allocation3], 1
    %86 = vsyncpa [#allocation6], 1
    %87 = vsyncpa [#allocation4], 1

</llo_original>
